<compile_context>
chip_gen: v7x
topology: tpu7x:2x2x1
jax: 0.10.0
libtpu: 0.0.40
codegen_flags: <defaults>
</compile_context>

<pallas_src>
import functools

import jax
import jax.numpy as jnp
from jax import lax
from jax.experimental import pallas as pl
from jax.experimental.pallas import tpu as pltpu

# Unmasked taps (ky, kx) of the 3x3 masked convs (yc = xc = 1, centered=True):
#   'V' mask: rows 0..yc, all columns
#   'H' mask: row yc, columns 0..xc
V_TAPS = [(0, 0), (0, 1), (0, 2), (1, 0), (1, 1), (1, 2)]
H_TAPS = [(1, 0), (1, 1)]


def _gated_kernel(vpad_ref, hpad_ref, mask_ref,
                  wc_ref, bc_ref, w1_ref, b1_ref,
                  vout_ref, hout_ref,
                  *, W, HW, OFF, C):
    """One batch element per grid step.  All compute is (channels, HW).

    vpad_ref/hpad_ref: (1, Cin_p, HWP) f32  flat slabs, zero-padded by OFF on
                       both ends of the flattened spatial axis.
    mask_ref         : (2, HW) f32   row0 = (col >= 1), row1 = (col <= W-2).
    wc_ref           : (4C, (Tv+Th)*Cin_p) bf16 fused masked-conv weight with
                       the vert->horiz 1x1 conv folded in; output row order is
                       [v_val; h_val; v_gate; h_gate].
    bc_ref           : (4C, 1) f32   matching fused bias.
    w1_ref / b1_ref  : (C, C) / (C, 1) f32  final 1x1 conv on gated h features.
    vout_ref/hout_ref: (1, C, HW) f32.
    """
    masks = mask_ref[...]
    mask_l = masks[0:1, :]          # valid where col >= 1   (kx == 0 taps)
    mask_r = masks[1:2, :]          # valid where col <= W-2 (kx == 2 taps)

    v_full = vpad_ref[0]            # (Cin_p, HWP) f32
    h_full = hpad_ref[0]

    def shifted(full, ky, kx):
        # Conv tap (ky, kx) reads input at flat offset s = (ky-1)*W + (kx-1);
        # flat zero padding supplies the top-row zeros, the column masks the
        # left/right image-edge zeros.
        off = OFF + (ky - 1) * W + (kx - 1)             # static python int
        piece = full[:, off:off + HW]
        if kx == 0:
            piece = piece * mask_l
        elif kx == 2:
            piece = piece * mask_r
        return piece

    # Fused im2col-style tap stack: V taps from the v slab, H taps from the
    # h slab, concatenated along the contraction axis (f32 concat is
    # tile-aligned, then one packed cast to bf16).
    pieces = [shifted(v_full, ky, kx) for ky, kx in V_TAPS]
    pieces += [shifted(h_full, ky, kx) for ky, kx in H_TAPS]
    taps = jnp.concatenate(pieces, axis=0).astype(jnp.bfloat16)   # (K, HW)

    # ONE MXU matmul computes v_val / h_val / v_gate / h_gate (the
    # vert->horiz 1x1 conv was folded into wc/bc in the wrapper).
    feat = jnp.dot(wc_ref[...], taps,
                   preferred_element_type=jnp.float32) + bc_ref[...]   # (4C, HW)

    # Gated activations for BOTH stacks in one shot:
    #   rows [0:2C] = [v_val; h_val], rows [2C:4C] = [v_gate; h_gate].
    gated = jnp.tanh(feat[:2 * C, :]) * jax.nn.sigmoid(feat[2 * C:, :])  # (2C, HW)

    vout_ref[0] = gated[:C, :]

    # h_stack_out = conv_horiz_1x1(h_gated) + h_stack (residual, f32 exact).
    hout_ref[0] = (jnp.dot(w1_ref[...], gated[C:, :],
                           preferred_element_type=jnp.float32)
                   + b1_ref[...] + h_full[:C, OFF:OFF + HW])


def _flat_pad(x, cin_p, off):
    """NCHW -> (B, cin_p, H*W + 2*off) f32, channel- and flat-spatial-padded."""
    B, Cin, H, W = x.shape
    xf = x.reshape(B, Cin, H * W).astype(jnp.float32)
    return jnp.pad(xf, ((0, 0), (0, cin_p - Cin), (off, off)))


def _fuse_taps(w, taps, cin, cin_p):
    """(O, Cin, 3, 3) torch-layout weight -> fused (O, len(taps)*cin_p) f32."""
    cols = []
    for ky, kx in taps:
        tap = w[:, :, ky, kx].astype(jnp.float32)      # (O, Cin)
        if cin_p > cin:
            tap = jnp.pad(tap, ((0, 0), (0, cin_p - cin)))
        cols.append(tap)
    return jnp.concatenate(cols, axis=1)


def gated_masked_conv(v_stack, h_stack, params):
    """Forward pass of GatedMaskedConv.  Inputs/outputs are NCHW float32."""
    B, Cin, H, W = v_stack.shape
    C2 = params["w_vert"].shape[0]                     # 2 * c_out
    C = C2 // 2
    assert Cin == C, "residual add in the module requires c_in == c_out"
    HW = H * W
    OFF = ((W + 1 + 127) // 128) * 128                 # lane-aligned pad offset
    HWP = HW + 2 * OFF
    Cinp = ((Cin + 7) // 8) * 8                        # sublane-aligned channels
    Tv, Th = len(V_TAPS), len(H_TAPS)
    Kf = (Tv + Th) * Cinp                              # fused contraction length

    # ---- glue: single flat padded slab per stack (no per-tap duplication).
    vpad = _flat_pad(v_stack, Cinp, OFF)               # (B, Cinp, HWP) f32
    hpad = _flat_pad(h_stack, Cinp, OFF)

    # Column-boundary masks (left/right image edges).
    col = jnp.arange(HW, dtype=jnp.int32) % W
    masks = jnp.stack([(col >= 1), (col <= W - 2)]).astype(jnp.float32)  # (2, HW)

    # ---- glue: per-tap weights + folded vert->horiz 1x1 conv.
    wv = _fuse_taps(params["w_vert"], V_TAPS, Cin, Cinp)      # (2C, Tv*Cinp)
    wh = _fuse_taps(params["w_horiz"], H_TAPS, Cin, Cinp)     # (2C, Th*Cinp)
    wv2h = params["w_v2h"][:, :, 0, 0].astype(jnp.float32)    # (2C, 2C)
    w1 = params["w_1x1"][:, :, 0, 0].astype(jnp.float32)      # (C, C)
    bv = params["b_vert"].astype(jnp.float32)                 # (2C,)
    bh = params["b_horiz"].astype(jnp.float32)                # (2C,)
    bv2h = params["b_v2h"].astype(jnp.float32)                # (2C,)
    b1 = params["b_1x1"].reshape(C, 1).astype(jnp.float32)    # (C, 1)

    # Fold conv_vert_to_horiz into the masked-conv weights:
    #   h_feat = wh @ h_taps + bh + wv2h @ (wv @ v_taps + bv) + bv2h
    #          = [wv2h@wv | wh] @ [v_taps; h_taps] + (bh + bv2h + wv2h@bv)
    wvh = wv2h @ wv                                           # (2C, Tv*Cinp)
    bhf = bh + bv2h + wv2h @ bv                               # (2C,)
    zeros_h = jnp.zeros((C, Th * Cinp), jnp.float32)

    # Output-row order [v_val; h_val; v_gate; h_gate] so one tanh*sigmoid over
    # a (2C, HW) slab yields both gated stacks.
    wc = jnp.concatenate([
        jnp.concatenate([wv[:C],  zeros_h], axis=1),          # v_val
        jnp.concatenate([wvh[:C], wh[:C]],  axis=1),          # h_val
        jnp.concatenate([wv[C:],  zeros_h], axis=1),          # v_gate
        jnp.concatenate([wvh[C:], wh[C:]],  axis=1),          # h_gate
    ], axis=0).astype(jnp.bfloat16)                           # (4C, Kf)
    bc = jnp.concatenate([bv[:C], bhf[:C], bv[C:], bhf[C:]]).reshape(4 * C, 1)

    kernel = functools.partial(_gated_kernel, W=W, HW=HW, OFF=OFF, C=C)
    per_batch = lambda b: (b, 0, 0)
    const2 = lambda b: (0, 0)

    vout, hout = pl.pallas_call(
        kernel,
        out_shape=(jax.ShapeDtypeStruct((B, C, HW), jnp.float32),
                   jax.ShapeDtypeStruct((B, C, HW), jnp.float32)),
        grid=(B,),
        in_specs=[
            pl.BlockSpec((1, Cinp, HWP), per_batch),       # vpad slab
            pl.BlockSpec((1, Cinp, HWP), per_batch),       # hpad slab
            pl.BlockSpec((2, HW), const2),                 # column masks
            pl.BlockSpec((4 * C, Kf), const2),             # fused weight (bf16)
            pl.BlockSpec((4 * C, 1), const2),              # fused bias
            pl.BlockSpec((C, C), const2),                  # w1 (1x1)
            pl.BlockSpec((C, 1), const2),                  # b1
        ],
        out_specs=[pl.BlockSpec((1, C, HW), per_batch),
                   pl.BlockSpec((1, C, HW), per_batch)],
        compiler_params=pltpu.CompilerParams(
            dimension_semantics=("parallel",)),
    )(vpad, hpad, masks, wc, bc, w1, b1)

    # ---- glue: (B, C, HW) -> NCHW (no transpose needed, layout is already CHW).
    return vout.reshape(B, C, H, W), hout.reshape(B, C, H, W)


def init_params(key, c_in, c_out):
    """Deterministic synthetic parameters (same shapes as the torch module)."""
    ks = jax.random.split(key, 10)
    c2 = 2 * c_out

    def kaiming(k, shape):
        fan_in = shape[1] * shape[2] * shape[3]
        return jnp.sqrt(2.0 / fan_in) * jax.random.normal(k, shape, jnp.float32)

    def bias(k, n, fan_in):
        bound = 1.0 / jnp.sqrt(fan_in)
        return jax.random.uniform(k, (n,), jnp.float32, -bound, bound)

    return {
        "w_vert":  kaiming(ks[0], (c2, c_in, 3, 3)),
        "b_vert":  bias(ks[1], c2, c_in * 9),
        "w_horiz": kaiming(ks[2], (c2, c_in, 3, 3)),
        "b_horiz": bias(ks[3], c2, c_in * 9),
        "w_v2h":   kaiming(ks[4], (c2, c2, 1, 1)),
        "b_v2h":   bias(ks[5], c2, c2),
        "w_1x1":   kaiming(ks[6], (c_out, c_out, 1, 1)),
        "b_1x1":   bias(ks[7], c_out, c_out),
        # conv_horiz_skip exists in the torch __init__ but is unused in forward.
    }


def reference_forward(v_stack, h_stack, params):
    """Pure-JAX f32 reference mirroring the PyTorch forward (NCHW)."""
    def conv(x, w, b, pad):
        y = lax.conv_general_dilated(
            x, w, (1, 1), [(pad, pad), (pad, pad)],
            dimension_numbers=("NCHW", "OIHW", "NCHW"),
            precision=lax.Precision.HIGHEST)
        return y + b[None, :, None, None]

    mask_v = jnp.zeros_like(params["w_vert"]).at[:, :, :2, :].set(1.0)
    mask_h = jnp.zeros_like(params["w_horiz"]).at[:, :, 1, :2].set(1.0)

    v_feat = conv(v_stack, params["w_vert"] * mask_v, params["b_vert"], 1)
    v_val, v_gate = jnp.split(v_feat, 2, axis=1)
    v_out = jnp.tanh(v_val) * jax.nn.sigmoid(v_gate)

    h_feat = conv(h_stack, params["w_horiz"] * mask_h, params["b_horiz"], 1)
    h_feat = h_feat + conv(v_feat, params["w_v2h"], params["b_v2h"], 0)
    h_val, h_gate = jnp.split(h_feat, 2, axis=1)
    h_gated = jnp.tanh(h_val) * jax.nn.sigmoid(h_gate)
    h_out = conv(h_gated, params["w_1x1"], params["b_1x1"], 0) + h_stack
    return v_out, h_out


if __name__ == "__main__":
    import numpy as np

    B, C, H, W = 2, 4, 16, 16   # c_in == c_out (required by the residual add)
    key = jax.random.PRNGKey(0)
    k_v, k_h, k_p = jax.random.split(key, 3)
    v_stack = jax.random.normal(k_v, (B, C, H, W), jnp.float32)
    h_stack = jax.random.normal(k_h, (B, C, H, W), jnp.float32)
    params = init_params(k_p, C, C)

    v_out, h_out = jax.jit(gated_masked_conv)(v_stack, h_stack, params)
    jax.block_until_ready((v_out, h_out))

    # Tolerances account for bf16 MXU operands in the fused masked conv
    # (accumulation stays f32); real tap/mask/layout bugs are O(0.3+) errors.
    v_ref, h_ref = reference_forward(v_stack, h_stack, params)
    np.testing.assert_allclose(np.asarray(v_out), np.asarray(v_ref),
                               rtol=2e-2, atol=3e-2)
    np.testing.assert_allclose(np.asarray(h_out), np.asarray(h_ref),
                               rtol=2e-2, atol=3e-2)
    print("KERNEL_OK")
</pallas_src>

<mosaic_0001>
module attributes {stable_mosaic.version = 11 : i64} {
  func.func @_gated_kernel(%arg0: i32, %arg1: memref<1x8x512xf32, #tpu.memory_space<vmem>>, %arg2: memref<1x8x512xf32, #tpu.memory_space<vmem>>, %arg3: memref<2x256xf32, #tpu.memory_space<vmem>>, %arg4: memref<16x64xbf16, #tpu.memory_space<vmem>>, %arg5: memref<16x1xf32, #tpu.memory_space<vmem>>, %arg6: memref<4x4xf32, #tpu.memory_space<vmem>>, %arg7: memref<4x1xf32, #tpu.memory_space<vmem>>, %arg8: memref<1x4x256xf32, #tpu.memory_space<vmem>>, %arg9: memref<1x4x256xf32, #tpu.memory_space<vmem>>) attributes {dimension_semantics = [#tpu.dimension_semantics<parallel>], iteration_bounds = array<i64: 2>, scalar_prefetch = 0 : i64, scratch_operands = 0 : i64, tpu.core_type = #tpu.core_type<tc>, window_params = [{transform_indices = @transform_0, window_bounds = array<i64: 1, 8, 512>}, {transform_indices = @transform_1, window_bounds = array<i64: 1, 8, 512>}, {pipeline_mode = #tpu.pipeline_mode<synchronous>, transform_indices = @transform_2, window_bounds = array<i64: 2, 256>}, {pipeline_mode = #tpu.pipeline_mode<synchronous>, transform_indices = @transform_3, window_bounds = array<i64: 16, 64>}, {pipeline_mode = #tpu.pipeline_mode<synchronous>, transform_indices = @transform_4, window_bounds = array<i64: 16, 1>}, {pipeline_mode = #tpu.pipeline_mode<synchronous>, transform_indices = @transform_5, window_bounds = array<i64: 4, 4>}, {pipeline_mode = #tpu.pipeline_mode<synchronous>, transform_indices = @transform_6, window_bounds = array<i64: 4, 1>}, {transform_indices = @transform_7, window_bounds = array<i64: 1, 4, 256>}, {transform_indices = @transform_8, window_bounds = array<i64: 1, 4, 256>}]} {
    %c0 = arith.constant 0 : index
    %c0_0 = arith.constant 0 : index
    %0 = vector.load %arg3[%c0, %c0_0] : memref<2x256xf32, #tpu.memory_space<vmem>>, vector<2x256xf32>
    %1 = vector.extract_strided_slice %0 {offsets = [0, 0], sizes = [1, 256], strides = [1, 1]} : vector<2x256xf32> to vector<1x256xf32>
    %2 = vector.extract_strided_slice %0 {offsets = [1, 0], sizes = [1, 256], strides = [1, 1]} : vector<2x256xf32> to vector<1x256xf32>
    %c0_1 = arith.constant 0 : index
    %c0_2 = arith.constant 0 : index
    %c0_3 = arith.constant 0 : index
    %3 = vector.load %arg1[%c0_1, %c0_2, %c0_3] : memref<1x8x512xf32, #tpu.memory_space<vmem>>, vector<1x8x512xf32>
    %4 = vector.shape_cast %3 : vector<1x8x512xf32> to vector<8x512xf32>
    %c0_4 = arith.constant 0 : index
    %c0_5 = arith.constant 0 : index
    %c0_6 = arith.constant 0 : index
    %5 = vector.load %arg2[%c0_4, %c0_5, %c0_6] : memref<1x8x512xf32, #tpu.memory_space<vmem>>, vector<1x8x512xf32>
    %6 = vector.shape_cast %5 : vector<1x8x512xf32> to vector<8x512xf32>
    %7 = vector.extract_strided_slice %4 {offsets = [0, 111], sizes = [8, 256], strides = [1, 1]} : vector<8x512xf32> to vector<8x256xf32>
    %8 = vector.broadcast %1 : vector<1x256xf32> to vector<8x256xf32>
    %9 = arith.mulf %7, %8 : vector<8x256xf32>
    %10 = vector.extract_strided_slice %4 {offsets = [0, 112], sizes = [8, 256], strides = [1, 1]} : vector<8x512xf32> to vector<8x256xf32>
    %11 = vector.extract_strided_slice %4 {offsets = [0, 113], sizes = [8, 256], strides = [1, 1]} : vector<8x512xf32> to vector<8x256xf32>
    %12 = vector.broadcast %2 : vector<1x256xf32> to vector<8x256xf32>
    %13 = arith.mulf %11, %12 : vector<8x256xf32>
    %14 = vector.extract_strided_slice %4 {offsets = [0, 127], sizes = [8, 256], strides = [1, 1]} : vector<8x512xf32> to vector<8x256xf32>
    %15 = vector.broadcast %1 : vector<1x256xf32> to vector<8x256xf32>
    %16 = arith.mulf %14, %15 : vector<8x256xf32>
    %17 = vector.extract_strided_slice %4 {offsets = [0, 128], sizes = [8, 256], strides = [1, 1]} : vector<8x512xf32> to vector<8x256xf32>
    %18 = vector.extract_strided_slice %4 {offsets = [0, 129], sizes = [8, 256], strides = [1, 1]} : vector<8x512xf32> to vector<8x256xf32>
    %19 = vector.broadcast %2 : vector<1x256xf32> to vector<8x256xf32>
    %20 = arith.mulf %18, %19 : vector<8x256xf32>
    %21 = vector.extract_strided_slice %6 {offsets = [0, 127], sizes = [8, 256], strides = [1, 1]} : vector<8x512xf32> to vector<8x256xf32>
    %22 = vector.broadcast %1 : vector<1x256xf32> to vector<8x256xf32>
    %23 = arith.mulf %21, %22 : vector<8x256xf32>
    %24 = vector.extract_strided_slice %6 {offsets = [0, 128], sizes = [8, 256], strides = [1, 1]} : vector<8x512xf32> to vector<8x256xf32>
    %25 = tpu.concatenate %9, %10, %13, %16, %17, %20, %23, %24 in 0 : vector<8x256xf32>, vector<8x256xf32>, vector<8x256xf32>, vector<8x256xf32>, vector<8x256xf32>, vector<8x256xf32>, vector<8x256xf32>, vector<8x256xf32> -> vector<64x256xf32>
    %26 = arith.truncf %25 : vector<64x256xf32> to vector<64x256xbf16>
    %c0_7 = arith.constant 0 : index
    %c0_8 = arith.constant 0 : index
    %27 = vector.load %arg4[%c0_7, %c0_8] : memref<16x64xbf16, #tpu.memory_space<vmem>>, vector<16x64xbf16>
    %cst = arith.constant dense<0.000000e+00> : vector<16x256xf32>
    %28 = tpu.matmul %27, %26, %cst {dimension_numbers = #tpu.dot_dimension_numbers<[1], [0], [0], [1], [0, 0, 1, 1], [], []>} : vector<16x64xbf16>, vector<64x256xbf16>, vector<16x256xf32> -> vector<16x256xf32>
    %c0_9 = arith.constant 0 : index
    %c0_10 = arith.constant 0 : index
    %29 = vector.load %arg5[%c0_9, %c0_10] : memref<16x1xf32, #tpu.memory_space<vmem>>, vector<16x1xf32>
    %30 = vector.broadcast %29 : vector<16x1xf32> to vector<16x256xf32>
    %31 = arith.addf %28, %30 : vector<16x256xf32>
    %32 = vector.extract_strided_slice %31 {offsets = [0, 0], sizes = [8, 256], strides = [1, 1]} : vector<16x256xf32> to vector<8x256xf32>
    %33 = math.tanh %32 : vector<8x256xf32>
    %34 = vector.extract_strided_slice %31 {offsets = [8, 0], sizes = [8, 256], strides = [1, 1]} : vector<16x256xf32> to vector<8x256xf32>
    %35 = arith.negf %34 : vector<8x256xf32>
    %36 = math.exp %35 : vector<8x256xf32>
    %cst_11 = arith.constant 1.000000e+00 : f32
    %37 = vector.broadcast %cst_11 : f32 to vector<8x256xf32>
    %38 = arith.addf %37, %36 : vector<8x256xf32>
    %39 = arith.divf %37, %38 : vector<8x256xf32>
    %40 = arith.mulf %33, %39 : vector<8x256xf32>
    %41 = vector.extract_strided_slice %40 {offsets = [0, 0], sizes = [4, 256], strides = [1, 1]} : vector<8x256xf32> to vector<4x256xf32>
    %c0_12 = arith.constant 0 : index
    %c0_13 = arith.constant 0 : index
    %c0_14 = arith.constant 0 : index
    %42 = vector.load %arg8[%c0_12, %c0_13, %c0_14] : memref<1x4x256xf32, #tpu.memory_space<vmem>>, vector<1x4x256xf32>
    %43 = vector.shape_cast %42 : vector<1x4x256xf32> to vector<4x256xf32>
    %44 = vector.shape_cast %41 : vector<4x256xf32> to vector<1x4x256xf32>
    tpu.vector_store %arg8[%c0_12, %c0_13, %c0_14], %44 {strides = array<i32>} : memref<1x4x256xf32, #tpu.memory_space<vmem>>, vector<1x4x256xf32>,
    %c0_15 = arith.constant 0 : index
    %c0_16 = arith.constant 0 : index
    %45 = vector.load %arg6[%c0_15, %c0_16] : memref<4x4xf32, #tpu.memory_space<vmem>>, vector<4x4xf32>
    %46 = vector.extract_strided_slice %40 {offsets = [4, 0], sizes = [4, 256], strides = [1, 1]} : vector<8x256xf32> to vector<4x256xf32>
    %cst_17 = arith.constant dense<0.000000e+00> : vector<4x256xf32>
    %47 = tpu.matmul %45, %46, %cst_17 {dimension_numbers = #tpu.dot_dimension_numbers<[1], [0], [0], [1], [0, 0, 1, 1], [], []>} : vector<4x4xf32>, vector<4x256xf32>, vector<4x256xf32> -> vector<4x256xf32>
    %c0_18 = arith.constant 0 : index
    %c0_19 = arith.constant 0 : index
    %48 = vector.load %arg7[%c0_18, %c0_19] : memref<4x1xf32, #tpu.memory_space<vmem>>, vector<4x1xf32>
    %49 = vector.broadcast %48 : vector<4x1xf32> to vector<4x256xf32>
    %50 = arith.addf %47, %49 : vector<4x256xf32>
    %51 = vector.extract_strided_slice %6 {offsets = [0, 128], sizes = [4, 256], strides = [1, 1]} : vector<8x512xf32> to vector<4x256xf32>
    %52 = arith.addf %50, %51 : vector<4x256xf32>
    %c0_20 = arith.constant 0 : index
    %c0_21 = arith.constant 0 : index
    %c0_22 = arith.constant 0 : index
    %53 = vector.load %arg9[%c0_20, %c0_21, %c0_22] : memref<1x4x256xf32, #tpu.memory_space<vmem>>, vector<1x4x256xf32>
    %54 = vector.shape_cast %53 : vector<1x4x256xf32> to vector<4x256xf32>
    %55 = vector.shape_cast %52 : vector<4x256xf32> to vector<1x4x256xf32>
    tpu.vector_store %arg9[%c0_20, %c0_21, %c0_22], %55 {strides = array<i32>} : memref<1x4x256xf32, #tpu.memory_space<vmem>>, vector<1x4x256xf32>,
    return
  }
  func.func @transform_0(%arg0: i32) -> (i32, i32, i32) {
    %c0_i32 = arith.constant 0 : i32
    %c0_i32_0 = arith.constant 0 : i32
    %c0_i32_1 = arith.constant 0 : i32
    return %arg0, %c0_i32, %c0_i32_0 : i32, i32, i32
  }
  func.func @transform_1(%arg0: i32) -> (i32, i32, i32) {
    %c0_i32 = arith.constant 0 : i32
    %c0_i32_0 = arith.constant 0 : i32
    %c0_i32_1 = arith.constant 0 : i32
    return %arg0, %c0_i32, %c0_i32_0 : i32, i32, i32
  }
  func.func @transform_2(%arg0: i32) -> (i32, i32) {
    %c0_i32 = arith.constant 0 : i32
    %c0_i32_0 = arith.constant 0 : i32
    %c0_i32_1 = arith.constant 0 : i32
    return %c0_i32, %c0_i32_0 : i32, i32
  }
  func.func @transform_3(%arg0: i32) -> (i32, i32) {
    %c0_i32 = arith.constant 0 : i32
    %c0_i32_0 = arith.constant 0 : i32
    %c0_i32_1 = arith.constant 0 : i32
    return %c0_i32, %c0_i32_0 : i32, i32
  }
  func.func @transform_4(%arg0: i32) -> (i32, i32) {
    %c0_i32 = arith.constant 0 : i32
    %c0_i32_0 = arith.constant 0 : i32
    %c0_i32_1 = arith.constant 0 : i32
    return %c0_i32, %c0_i32_0 : i32, i32
  }
  func.func @transform_5(%arg0: i32) -> (i32, i32) {
    %c0_i32 = arith.constant 0 : i32
    %c0_i32_0 = arith.constant 0 : i32
    %c0_i32_1 = arith.constant 0 : i32
    return %c0_i32, %c0_i32_0 : i32, i32
  }
  func.func @transform_6(%arg0: i32) -> (i32, i32) {
    %c0_i32 = arith.constant 0 : i32
    %c0_i32_0 = arith.constant 0 : i32
    %c0_i32_1 = arith.constant 0 : i32
    return %c0_i32, %c0_i32_0 : i32, i32
  }
  func.func @transform_7(%arg0: i32) -> (i32, i32, i32) {
    %c0_i32 = arith.constant 0 : i32
    %c0_i32_0 = arith.constant 0 : i32
    %c0_i32_1 = arith.constant 0 : i32
    return %arg0, %c0_i32, %c0_i32_0 : i32, i32, i32
  }
  func.func @transform_8(%arg0: i32) -> (i32, i32, i32) {
    %c0_i32 = arith.constant 0 : i32
    %c0_i32_0 = arith.constant 0 : i32
    %c0_i32_1 = arith.constant 0 : i32
    return %arg0, %c0_i32, %c0_i32_0 : i32, i32, i32
  }
}

</mosaic_0001>

<llo_original>
// kernel: gated_masked_conv.1
$region0: #{gated_masked_conv.1}
  #allocation0 [shape = 'u32[]', space=smem, size = 0x4, offset = 0x4, fixed_abs, tag = 'smem constant byte address 0x4 - core index']
  #allocation1 [shape = 'u32[144,128]{1,0:T(1,128)}', space=vmem, size = 0x12000, scoped, tag = 'internal scratch']
  %s0 = inlined_call_operand.vmem [shape: f32[2,8,512], index: 0, kind: input, shape index: {}]
  %s1 = inlined_call_operand.vmem [shape: f32[2,8,512], index: 1, kind: input, shape index: {}]
  %s2 = inlined_call_operand.vmem [shape: f32[2,256], index: 2, kind: input, shape index: {}]
  %s3 = inlined_call_operand.vmem [shape: bf16[16,64], index: 3, kind: input, shape index: {}]
  %s4 = inlined_call_operand.vmem [shape: f32[16,1], index: 4, kind: input, shape index: {}]
  %s5 = inlined_call_operand.vmem [shape: f32[4,4], index: 5, kind: input, shape index: {}]
  %s6 = inlined_call_operand.vmem [shape: f32[4,1], index: 6, kind: input, shape index: {}]
  %s7 = inlined_call_operand.vmem [shape: f32[2,4,256], index: 7, kind: output, shape index: {0}]
  %s8 = inlined_call_operand.vmem [shape: f32[2,4,256], index: 8, kind: output, shape index: {1}]
  %9 = xla_tuple %s7, %s8
  %s10 = sld [smem:[#allocation0]]
  $region69: #{gated_masked_conv.1} parent=0
    _
  %s12 = ssub.s32 1, %s10
  %s13 = scalar_select 0, %s12, %s10
  loop: start=0, step=1, limit=4
  $region2: #{gated_masked_conv.1} parent=0 // loop_pre_header
    _
  $region3: #{gated_masked_conv.1} parent=0 // loop_header
    %s15 = sphi 0, %s19
    %p16 = scmp.ge.s32.totalorder %s15, 4
    %s25 = sphi 0, %s27
    %s28 = sphi 0, %s25
    %s29 = sphi 0, %s28
    %s45 = sphi 0, %s29
    %s51 = sphi 0, %s53
    %s54 = sphi 0, %s51
    %s55 = sphi 0, %s54
    %s71 = sphi 0, %s55
    %s75 = sphi 0, %s75
    %s77 = sphi 0, %s75
    %s78 = sphi 0, %s77
    %s92 = sphi 0, %s78
    %s96 = sphi 0, %s96
    %s98 = sphi 0, %s96
    %s99 = sphi 0, %s98
    %s113 = sphi 0, %s99
    %s117 = sphi 0, %s117
    %s119 = sphi 0, %s117
    %s120 = sphi 0, %s119
    %s134 = sphi 0, %s120
    %s138 = sphi 0, %s138
    %s140 = sphi 0, %s138
    %s141 = sphi 0, %s140
    %s155 = sphi 0, %s141
    %s159 = sphi 0, %s159
    %s161 = sphi 0, %s159
    %s162 = sphi 0, %s161
    %s176 = sphi 0, %s162
    %s182 = sphi 0, %s184
    %s185 = sphi 0, %s182
    %s186 = sphi 0, %s185
    %s202 = sphi 0, %s186
    %s208 = sphi 0, %s210
    %s211 = sphi 0, %s208
    %s212 = sphi 0, %s211
    %s228 = sphi 0, %s212
  $region4: #{gated_masked_conv.1} parent=0 // loop_header_branch
    %18 = sbr.rel (%p16) target = $region8
  $region5: #{gated_masked_conv.1} parent=0 // loop_body
    %s20 = ssub.s32 %s15, 1
    %s21 = ssub.s32 %s15, 2
    %s22 = sadd.s32 %s15, 1
    %s23 = ssub.s32 %s15, %s22
    %p24 = scmp.eq.s32.totalorder %s23, 0
    %s26 = sadd.s32 %s25, 1
    %s27 = scalar_select %p24, %s25, %s26
    %p30 = pneg %p24
    %p31 = scmp.eq.s32.totalorder %s15, 1
    %p32 = por %p30, %p31
    %p33 = scmp.ne.s32.totalorder %s25, %s28
    %p34 = scmp.eq.s32.totalorder %s15, 0
    %p35 = por %p33, %p34
    %p36 = scmp.ne.s32.totalorder %s25, %s28
    %p37 = scmp.eq.s32.totalorder %s20, 1
    %p38 = por %p36, %p37
    %p39 = scmp.ne.s32.totalorder %s28, %s29
    %p40 = scmp.eq.s32.totalorder %s20, 0
    %p41 = por %p39, %p40
    %p42 = scmp.ne.s32.totalorder %s28, %s29
    %p43 = scmp.eq.s32.totalorder %s21, 1
    %p44 = por %p42, %p43
    %p46 = scmp.ne.s32.totalorder %s29, %s45
    %p47 = scmp.eq.s32.totalorder %s21, 0
    %p48 = por %p46, %p47
    %s49 = ssub.s32 %s15, %s22
    %p50 = scmp.eq.s32.totalorder %s49, 0
    %s52 = sadd.s32 %s51, 1
    %s53 = scalar_select %p50, %s51, %s52
    %p56 = pneg %p50
    %p57 = scmp.eq.s32.totalorder %s15, 1
    %p58 = por %p56, %p57
    %p59 = scmp.ne.s32.totalorder %s51, %s54
    %p60 = scmp.eq.s32.totalorder %s15, 0
    %p61 = por %p59, %p60
    %p62 = scmp.ne.s32.totalorder %s51, %s54
    %p63 = scmp.eq.s32.totalorder %s20, 1
    %p64 = por %p62, %p63
    %p65 = scmp.ne.s32.totalorder %s54, %s55
    %p66 = scmp.eq.s32.totalorder %s20, 0
    %p67 = por %p65, %p66
    %p68 = scmp.ne.s32.totalorder %s54, %s55
    %p69 = scmp.eq.s32.totalorder %s21, 1
    %p70 = por %p68, %p69
    %p72 = scmp.ne.s32.totalorder %s55, %s71
    %p73 = scmp.eq.s32.totalorder %s21, 0
    %p74 = por %p72, %p73
    %s76 = sadd.s32 %s75, 1
    %p79 = scmp.eq.s32.totalorder %s15, 1
    %p80 = scmp.ne.s32.totalorder %s75, %s77
    %p81 = scmp.eq.s32.totalorder %s15, 0
    %p82 = por %p80, %p81
    %p83 = scmp.ne.s32.totalorder %s75, %s77
    %p84 = scmp.eq.s32.totalorder %s20, 1
    %p85 = por %p83, %p84
    %p86 = scmp.ne.s32.totalorder %s77, %s78
    %p87 = scmp.eq.s32.totalorder %s20, 0
    %p88 = por %p86, %p87
    %p89 = scmp.ne.s32.totalorder %s77, %s78
    %p90 = scmp.eq.s32.totalorder %s21, 1
    %p91 = por %p89, %p90
    %p93 = scmp.ne.s32.totalorder %s78, %s92
    %p94 = scmp.eq.s32.totalorder %s21, 0
    %p95 = por %p93, %p94
    %s97 = sadd.s32 %s96, 1
    %p100 = scmp.eq.s32.totalorder %s15, 1
    %p101 = scmp.ne.s32.totalorder %s96, %s98
    %p102 = scmp.eq.s32.totalorder %s15, 0
    %p103 = por %p101, %p102
    %p104 = scmp.ne.s32.totalorder %s96, %s98
    %p105 = scmp.eq.s32.totalorder %s20, 1
    %p106 = por %p104, %p105
    %p107 = scmp.ne.s32.totalorder %s98, %s99
    %p108 = scmp.eq.s32.totalorder %s20, 0
    %p109 = por %p107, %p108
    %p110 = scmp.ne.s32.totalorder %s98, %s99
    %p111 = scmp.eq.s32.totalorder %s21, 1
    %p112 = por %p110, %p111
    %p114 = scmp.ne.s32.totalorder %s99, %s113
    %p115 = scmp.eq.s32.totalorder %s21, 0
    %p116 = por %p114, %p115
    %s118 = sadd.s32 %s117, 1
    %p121 = scmp.eq.s32.totalorder %s15, 1
    %p122 = scmp.ne.s32.totalorder %s117, %s119
    %p123 = scmp.eq.s32.totalorder %s15, 0
    %p124 = por %p122, %p123
    %p125 = scmp.ne.s32.totalorder %s117, %s119
    %p126 = scmp.eq.s32.totalorder %s20, 1
    %p127 = por %p125, %p126
    %p128 = scmp.ne.s32.totalorder %s119, %s120
    %p129 = scmp.eq.s32.totalorder %s20, 0
    %p130 = por %p128, %p129
    %p131 = scmp.ne.s32.totalorder %s119, %s120
    %p132 = scmp.eq.s32.totalorder %s21, 1
    %p133 = por %p131, %p132
    %p135 = scmp.ne.s32.totalorder %s120, %s134
    %p136 = scmp.eq.s32.totalorder %s21, 0
    %p137 = por %p135, %p136
    %s139 = sadd.s32 %s138, 1
    %p142 = scmp.eq.s32.totalorder %s15, 1
    %p143 = scmp.ne.s32.totalorder %s138, %s140
    %p144 = scmp.eq.s32.totalorder %s15, 0
    %p145 = por %p143, %p144
    %p146 = scmp.ne.s32.totalorder %s138, %s140
    %p147 = scmp.eq.s32.totalorder %s20, 1
    %p148 = por %p146, %p147
    %p149 = scmp.ne.s32.totalorder %s140, %s141
    %p150 = scmp.eq.s32.totalorder %s20, 0
    %p151 = por %p149, %p150
    %p152 = scmp.ne.s32.totalorder %s140, %s141
    %p153 = scmp.eq.s32.totalorder %s21, 1
    %p154 = por %p152, %p153
    %p156 = scmp.ne.s32.totalorder %s141, %s155
    %p157 = scmp.eq.s32.totalorder %s21, 0
    %p158 = por %p156, %p157
    %s160 = sadd.s32 %s159, 1
    %p163 = scmp.eq.s32.totalorder %s15, 1
    %p164 = scmp.ne.s32.totalorder %s159, %s161
    %p165 = scmp.eq.s32.totalorder %s15, 0
    %p166 = por %p164, %p165
    %p167 = scmp.ne.s32.totalorder %s159, %s161
    %p168 = scmp.eq.s32.totalorder %s20, 1
    %p169 = por %p167, %p168
    %p170 = scmp.ne.s32.totalorder %s161, %s162
    %p171 = scmp.eq.s32.totalorder %s20, 0
    %p172 = por %p170, %p171
    %p173 = scmp.ne.s32.totalorder %s161, %s162
    %p174 = scmp.eq.s32.totalorder %s21, 1
    %p175 = por %p173, %p174
    %p177 = scmp.ne.s32.totalorder %s162, %s176
    %p178 = scmp.eq.s32.totalorder %s21, 0
    %p179 = por %p177, %p178
    %s180 = ssub.s32 %s15, %s22
    %p181 = scmp.eq.s32.totalorder %s180, 0
    %s183 = sadd.s32 %s182, 1
    %s184 = scalar_select %p181, %s182, %s183
    %p187 = pneg %p181
    %p188 = scmp.eq.s32.totalorder %s15, 1
    %p189 = por %p187, %p188
    %p190 = scmp.ne.s32.totalorder %s182, %s185
    %p191 = scmp.eq.s32.totalorder %s15, 0
    %p192 = por %p190, %p191
    %p193 = scmp.ne.s32.totalorder %s182, %s185
    %p194 = scmp.eq.s32.totalorder %s20, 1
    %p195 = por %p193, %p194
    %p196 = scmp.ne.s32.totalorder %s185, %s186
    %p197 = scmp.eq.s32.totalorder %s20, 0
    %p198 = por %p196, %p197
    %p199 = scmp.ne.s32.totalorder %s185, %s186
    %p200 = scmp.eq.s32.totalorder %s21, 1
    %p201 = por %p199, %p200
    %p203 = scmp.ne.s32.totalorder %s186, %s202
    %p204 = scmp.eq.s32.totalorder %s21, 0
    %p205 = por %p203, %p204
    %s206 = ssub.s32 %s15, %s22
    %p207 = scmp.eq.s32.totalorder %s206, 0
    %s209 = sadd.s32 %s208, 1
    %s210 = scalar_select %p207, %s208, %s209
    %p213 = pneg %p207
    %p214 = scmp.eq.s32.totalorder %s15, 1
    %p215 = por %p213, %p214
    %p216 = scmp.ne.s32.totalorder %s208, %s211
    %p217 = scmp.eq.s32.totalorder %s15, 0
    %p218 = por %p216, %p217
    %p219 = scmp.ne.s32.totalorder %s208, %s211
    %p220 = scmp.eq.s32.totalorder %s20, 1
    %p221 = por %p219, %p220
    %p222 = scmp.ne.s32.totalorder %s211, %s212
    %p223 = scmp.eq.s32.totalorder %s20, 0
    %p224 = por %p222, %p223
    %p225 = scmp.ne.s32.totalorder %s211, %s212
    %p226 = scmp.eq.s32.totalorder %s21, 1
    %p227 = por %p225, %p226
    %p229 = scmp.ne.s32.totalorder %s212, %s228
    %p230 = scmp.eq.s32.totalorder %s21, 0
    %p231 = por %p229, %p230
    %p232 = scmp.le.s32.totalorder 1, %s15
    %p233 = scmp.lt.s32.totalorder %s15, 3
    %p234 = pnand %p232, %p233
    %p235 = pneg %p234
    // Predicated region
    $region9: #{gated_masked_conv.1} parent=5 // pred_check
      _
    $region10: #{gated_masked_conv.1} parent=5 // pred_check_branch
      %237 = sbr.rel (%p234) target = $region12
    $region11: #{gated_masked_conv.1} parent=5 // pred_region
      %s238 = ssub.s32 %s15, 1
      // Predicated region
      $region13: #{gated_masked_conv.1} parent=11 // pred_check
        %p239 = pneg %p88
      $region14: #{gated_masked_conv.1} parent=11 // pred_check_branch
        %241 = sbr.rel (%p239) target = $region16
      $region15: #{gated_masked_conv.1} parent=11 // pred_region
        _
      $region16: #{gated_masked_conv.1} parent=11 // pred_fallthru
        _
      // Predicated region
      $region17: #{gated_masked_conv.1} parent=11 // pred_check
        %p242 = pneg %p109
      $region18: #{gated_masked_conv.1} parent=11 // pred_check_branch
        %244 = sbr.rel (%p242) target = $region20
      $region19: #{gated_masked_conv.1} parent=11 // pred_region
        _
      $region20: #{gated_masked_conv.1} parent=11 // pred_fallthru
        _
      // Predicated region
      $region21: #{gated_masked_conv.1} parent=11 // pred_check
        %p245 = pneg %p130
      $region22: #{gated_masked_conv.1} parent=11 // pred_check_branch
        %247 = sbr.rel (%p245) target = $region24
      $region23: #{gated_masked_conv.1} parent=11 // pred_region
        _
      $region24: #{gated_masked_conv.1} parent=11 // pred_fallthru
        _
      // Predicated region
      $region25: #{gated_masked_conv.1} parent=11 // pred_check
        %p248 = pneg %p151
      $region26: #{gated_masked_conv.1} parent=11 // pred_check_branch
        %250 = sbr.rel (%p248) target = $region28
      $region27: #{gated_masked_conv.1} parent=11 // pred_region
        _
      $region28: #{gated_masked_conv.1} parent=11 // pred_fallthru
        _
      // Predicated region
      $region29: #{gated_masked_conv.1} parent=11 // pred_check
        %p251 = pneg %p172
      $region30: #{gated_masked_conv.1} parent=11 // pred_check_branch
        %253 = sbr.rel (%p251) target = $region32
      $region31: #{gated_masked_conv.1} parent=11 // pred_region
        _
      $region32: #{gated_masked_conv.1} parent=11 // pred_fallthru
        _
    $region12: #{gated_masked_conv.1} parent=5 // pred_fallthru
      _
    %p254 = scmp.lt.s32.totalorder %s15, 2
    // Predicated region
    $region33: #{gated_masked_conv.1} parent=5 // pred_check
      %p255 = pneg %p254
    $region34: #{gated_masked_conv.1} parent=5 // pred_check_branch
      %257 = sbr.rel (%p255) target = $region36
    $region35: #{gated_masked_conv.1} parent=5 // pred_region
      // Predicated region
      $region37: #{gated_masked_conv.1} parent=35 // pred_check
        %p258 = pneg %p35
      $region38: #{gated_masked_conv.1} parent=35 // pred_check_branch
        %260 = sbr.rel (%p258) target = $region40
      $region39: #{gated_masked_conv.1} parent=35 // pred_region
        %p261 = scmp.lt.s32.totalorder %s15, 1
        %s262 = scalar_select %p261, %s15, 1
        %s263 = smul.addr %s262, 4
        %s264 = smul.addr %s263, 8
        %s265 = scalar_lea.vmem %s0, %s264
      $region40: #{gated_masked_conv.1} parent=35 // pred_fallthru
        _
      // Predicated region
      $region41: #{gated_masked_conv.1} parent=35 // pred_check
        %p266 = pneg %p61
      $region42: #{gated_masked_conv.1} parent=35 // pred_check_branch
        %268 = sbr.rel (%p266) target = $region44
      $region43: #{gated_masked_conv.1} parent=35 // pred_region
        %p269 = scmp.lt.s32.totalorder %s15, 1
        %s270 = scalar_select %p269, %s15, 1
        %s271 = smul.addr %s270, 4
        %s272 = smul.addr %s271, 8
        %s273 = scalar_lea.vmem %s1, %s272
      $region44: #{gated_masked_conv.1} parent=35 // pred_fallthru
        _
    $region36: #{gated_masked_conv.1} parent=5 // pred_fallthru
      _
    %p274 = scmp.le.s32.totalorder 1, %s15
    %p275 = scmp.lt.s32.totalorder %s15, 3
    %p276 = pnand %p274, %p275
    %p277 = pneg %p276
    // Predicated region
    $region45: #{gated_masked_conv.1} parent=5 // pred_check
      _
    $region46: #{gated_masked_conv.1} parent=5 // pred_check_branch
      %279 = sbr.rel (%p276) target = $region48
    $region47: #{gated_masked_conv.1} parent=5 // pred_region
      %s280 = ssub.s32 %s15, 1
      %p281 = scmp.lt.s32.totalorder %s20, 1
      %s282 = scalar_select %p281, %s20, 1
      %s283 = smul.addr %s282, 4
      %s284 = smul.addr %s283, 8
      %s285 = scalar_lea.vmem %s0, %s284
      %p286 = pneg %p41
      %p287 = pneg %p38
      %p288 = scmp.lt.s32.totalorder %s20, 1
      %s289 = scalar_select %p288, %s20, 1
      %s290 = smul.addr %s289, 4
      %s291 = smul.addr %s290, 8
      %s292 = scalar_lea.vmem %s1, %s291
      %p293 = pneg %p67
      %p294 = pneg %p64
      %p295 = pneg %p88
      %p296 = pneg %p85
      %p297 = pneg %p109
      %p298 = pneg %p106
      %p299 = pneg %p130
      %p300 = pneg %p127
      %p301 = pneg %p151
      %p302 = pneg %p148
      %p303 = pneg %p172
      %p304 = pneg %p169
      %p305 = pneg %p198
      %p306 = pneg %p195
      %p307 = scmp.lt.s32.totalorder %s20, 1
      %s308 = scalar_select %p307, %s20, 1
      %s309 = smul.addr %s308, 2
      %s310 = smul.addr %s309, 4
      %s311 = scalar_lea.vmem %s7, %s310
      %p312 = pneg %p224
      %p313 = pneg %p221
      %p314 = scmp.lt.s32.totalorder %s20, 1
      %s315 = scalar_select %p314, %s20, 1
      %s316 = smul.addr %s315, 2
      %s317 = smul.addr %s316, 4
      %s318 = scalar_lea.vmem %s8, %s317
      %p319 = scmp.lt.s32.totalorder %s20, 1
      %s320 = scalar_select %p319, %s20, 1
      %s321 = smul.addr %s320, 4
      %s322 = smul.addr %s321, 8
      %s323 = scalar_lea.vmem %s0, %s322
      %p324 = scmp.lt.s32.totalorder %s20, 1
      %s325 = scalar_select %p324, %s20, 1
      %s326 = smul.addr %s325, 4
      %s327 = smul.addr %s326, 8
      %s328 = scalar_lea.vmem %s1, %s327
      %p329 = scmp.lt.s32.totalorder %s20, 1
      %s330 = scalar_select %p329, %s20, 1
      %s331 = smul.addr %s330, 2
      %s332 = smul.addr %s331, 4
      %s333 = scalar_lea.vmem %s7, %s332
      %p334 = scmp.lt.s32.totalorder %s20, 1
      %s335 = scalar_select %p334, %s20, 1
      %s336 = smul.addr %s335, 2
      %s337 = smul.addr %s336, 4
      %s338 = scalar_lea.vmem %s8, %s337
      %v340 = vld [vmem:[%s2] sm:$0xf]
      %v341 = vld [vmem:[%s323] sm:$0xff]
      %v342 = vld [vmem:[%s323 + $0x8] sm:$0xff]
      %v343 = vld [vmem:[%s323 + $0x10] sm:$0xff]
      %v344 = vld [vmem:[%s323 + $0x18] sm:$0xff]
      %v345 = vld [vmem:[%s328] sm:$0xff]
      %v346 = vld [vmem:[%s328 + $0x8] sm:$0xff]
      %v347 = vld [vmem:[%s328 + $0x10] sm:$0xff]
      %v349 = vlaneseq
      %v350 = vshrl.u32 %v349, 7
      %v351 = vsub.s32 0, %v350
      %v352 = vrot.slane %v340, %v351
      %v353 = vlaneseq
      %v354 = vshrl.u32 %v353, 7
      %v355 = vsub.s32 2, %v354
      %v356 = vrot.slane %v340, %v355
      %v359 = vlaneseq
      %v360 = vshrl.u32 %v359, 7
      %v361 = vsub.s32 0, %v360
      %v362 = vrot.slane %v352, %v361
      %v363 = vlaneseq
      %v364 = vshrl.u32 %v363, 7
      %v365 = vsub.s32 0, %v364
      %v366 = vrot.slane %v356, %v365
      %369 = vrot.lane.b32.xlu0 %v362, 111
      %v370 = vpop.permute.xlu0 %369
      %371 = vrot.lane.b32.xlu0 %v366, 111
      %v372 = vpop.permute.xlu0 %371
      %vm373 = vcmask 908288
      %v374 = vsel %vm373, %v370, %v372
      %v378 = vmul.f32 %v341, %v370
      %v379 = vmul.f32 %v342, %v374
      %v380 = vmul.f32 %v343, %v372
      %v381 = vlaneseq
      %v382 = vshrl.u32 %v381, 7
      %v383 = vsub.s32 1, %v382
      %v384 = vrot.slane %v340, %v383
      %v385 = vlaneseq
      %v386 = vshrl.u32 %v385, 7
      %v387 = vsub.s32 3, %v386
      %v388 = vrot.slane %v340, %v387
      %v391 = vlaneseq
      %v392 = vshrl.u32 %v391, 7
      %v393 = vsub.s32 1, %v392
      %v394 = vrot.slane %v384, %v393
      %v395 = vlaneseq
      %v396 = vshrl.u32 %v395, 7
      %v397 = vsub.s32 1, %v396
      %v398 = vrot.slane %v388, %v397
      %401 = vrot.lane.b32.xlu0 %v394, 113
      %v402 = vpop.permute.xlu0 %401
      %403 = vrot.lane.b32.xlu0 %v398, 113
      %v404 = vpop.permute.xlu0 %403
      %vm405 = vcmask 924672
      %v406 = vsel %vm405, %v402, %v404
      %v410 = vmul.f32 %v341, %v402
      %v411 = vmul.f32 %v342, %v406
      %v412 = vmul.f32 %v343, %v404
      %413 = vrot.lane.b32.xlu0 %v362, 127
      %v414 = vpop.permute.xlu0 %413
      %415 = vrot.lane.b32.xlu0 %v366, 127
      %v416 = vpop.permute.xlu0 %415
      %vm417 = vcmask 1039360
      %v418 = vsel %vm417, %v414, %v416
      %v422 = vmul.f32 %v341, %v414
      %v423 = vmul.f32 %v342, %v418
      %v424 = vmul.f32 %v343, %v416
      %425 = vrot.lane.b32.xlu0 %v394, 1
      %v426 = vpop.permute.xlu0 %425
      %427 = vrot.lane.b32.xlu0 %v398, 1
      %v428 = vpop.permute.xlu0 %427
      %vm429 = vcmask 7168
      %v430 = vsel %vm429, %v426, %v428
      %v434 = vmul.f32 %v342, %v426
      %v435 = vmul.f32 %v343, %v430
      %v436 = vmul.f32 %v344, %v428
      %v437 = vmul.f32 %v345, %v414
      %v438 = vmul.f32 %v346, %v418
      %v439 = vmul.f32 %v347, %v416
      %443 = vrot.lane.b32.xlu0 %v341, 127
      %v444 = vpop.permute.xlu0 %443
      %445 = vrot.lane.b32.xlu0 %v342, 127
      %v446 = vpop.permute.xlu0 %445
      %447 = vrot.lane.b32.xlu0 %v343, 127
      %v448 = vpop.permute.xlu0 %447
      %v449 = vsel %vm417, %v444, %v446
      %v450 = vsel %vm417, %v446, %v448
      %457 = vrot.lane.b32.xlu0 %v410, 126
      %v458 = vpop.permute.xlu0 %457
      %459 = vrot.lane.b32.xlu0 %v411, 126
      %v460 = vpop.permute.xlu0 %459
      %461 = vrot.lane.b32.xlu0 %v412, 126
      %v462 = vpop.permute.xlu0 %461
      %vm463 = vcmask 1031168
      %v464 = vsel %vm463, %v458, %v460
      %v465 = vsel %vm463, %v460, %v462
      %472 = vrot.lane.b32.xlu0 %v422, 112
      %v473 = vpop.permute.xlu0 %472
      %474 = vrot.lane.b32.xlu0 %v423, 112
      %v475 = vpop.permute.xlu0 %474
      %476 = vrot.lane.b32.xlu0 %v424, 112
      %v477 = vpop.permute.xlu0 %476
      %vm478 = vcmask 916480
      %v479 = vsel %vm478, %v473, %v475
      %v480 = vsel %vm478, %v475, %v477
      %484 = vrot.lane.b32.xlu0 %v342, 111
      %v485 = vpop.permute.xlu0 %484
      %486 = vrot.lane.b32.xlu0 %v343, 111
      %v487 = vpop.permute.xlu0 %486
      %v488 = vsel %vm373, %v485, %v487
      %495 = vrot.lane.b32.xlu0 %v434, 110
      %v496 = vpop.permute.xlu0 %495
      %497 = vrot.lane.b32.xlu0 %v435, 110
      %v498 = vpop.permute.xlu0 %497
      %499 = vrot.lane.b32.xlu0 %v436, 110
      %v500 = vpop.permute.xlu0 %499
      %vm501 = vcmask 900096
      %v502 = vsel %vm501, %v496, %v498
      %v503 = vsel %vm501, %v498, %v500
      %510 = vrot.lane.b32.xlu0 %v437, 112
      %v511 = vpop.permute.xlu0 %510
      %512 = vrot.lane.b32.xlu0 %v438, 112
      %v513 = vpop.permute.xlu0 %512
      %514 = vrot.lane.b32.xlu0 %v439, 112
      %v515 = vpop.permute.xlu0 %514
      %v516 = vsel %vm478, %v511, %v513
      %v517 = vsel %vm478, %v513, %v515
      %523 = vrot.lane.b32.xlu0 %v346, 111
      %v524 = vpop.permute.xlu0 %523
      %525 = vrot.lane.b32.xlu0 %v347, 111
      %v526 = vpop.permute.xlu0 %525
      %v527 = vsel %vm373, %v524, %v526
      %v531 = vpack.c.bf16 %v449, %v378
      %v532 = vpack.c.bf16 %v450, %v379
      %v533 = vpack.c.bf16 %v448, %v380
      %v534 = vpack.c.bf16 %v479, %v464
      %v535 = vpack.c.bf16 %v480, %v465
      %v536 = vpack.c.bf16 %v477, %v462
      %v537 = vpack.c.bf16 %v496, %v485
      %v538 = vpack.c.bf16 %v502, %v488
      %v539 = vpack.c.bf16 %v503, %v487
      %v540 = vpack.c.bf16 %v524, %v516
      %v541 = vpack.c.bf16 %v527, %v517
      %v542 = vpack.c.bf16 %v526, %v515
      %v543 = vld [vmem:[%s3] sm:$0xf]
      %v544 = vld [vmem:[%s3 + $0x4] sm:$0xf]
      %v545 = vld [vmem:[%s4] sm:$0xff]
      %v546 = vld [vmem:[%s4 + $0x8] sm:$0xff]
      %548 = vset.pattern.permute.xlu0 0
      %549 = vperm.xlu0 %548, %v545
      %v550 = vpop.permute.xlu0 %549
      %553 = vset.pattern.permute.xlu0 0
      %554 = vperm.xlu0 %553, %v546
      %v555 = vpop.permute.xlu0 %554
      %v559 = vunpack.c.l.b16 %v543
      %v560 = vunpack.c.l.b16 %v544
      %v561 = vpack.c.b16 %v560, %v559
      %574 = vrot.lane.b32.xlu0 %v531, 17
      %v575 = vpop.permute.xlu0 %574
      %576 = vrot.lane.b32.xlu0 %v532, 17
      %v577 = vpop.permute.xlu0 %576
      %578 = vrot.lane.b32.xlu0 %v533, 17
      %v579 = vpop.permute.xlu0 %578
      %580 = vrot.lane.b32.xlu0 %v534, 17
      %v581 = vpop.permute.xlu0 %580
      %582 = vrot.lane.b32.xlu0 %v535, 17
      %v583 = vpop.permute.xlu0 %582
      %584 = vrot.lane.b32.xlu0 %v536, 17
      %v585 = vpop.permute.xlu0 %584
      %586 = vrot.lane.b32.xlu0 %v537, 17
      %v587 = vpop.permute.xlu0 %586
      %588 = vrot.lane.b32.xlu0 %v538, 17
      %v589 = vpop.permute.xlu0 %588
      %590 = vrot.lane.b32.xlu0 %v539, 17
      %v591 = vpop.permute.xlu0 %590
      %592 = vrot.lane.b32.xlu0 %v540, 17
      %v593 = vpop.permute.xlu0 %592
      %594 = vrot.lane.b32.xlu0 %v541, 17
      %v595 = vpop.permute.xlu0 %594
      %596 = vrot.lane.b32.xlu0 %v542, 17
      %v597 = vpop.permute.xlu0 %596
      %vm598 = vcmask 138240
      %v599 = vsel %vm598, %v575, %v577
      %v600 = vsel %vm598, %v577, %v579
      %v601 = vsel %vm598, %v581, %v583
      %v602 = vsel %vm598, %v583, %v585
      %v603 = vsel %vm598, %v587, %v589
      %v604 = vsel %vm598, %v589, %v591
      %v605 = vsel %vm598, %v593, %v595
      %v606 = vsel %vm598, %v595, %v597
      %vm615 = vcmask 523264
      %v617 = vsel %vm615, %v561, 0
      %619 = vmatprep.subr.bf16.mxu0 %v600
      %620 = vmatpush1.bf16.msra.mxu0 %v599
      %621 = vmatprep.subr.bf16.mxu0 %v602
      %622 = vmatpush1.bf16.msra.mxu0 %v601
      %623 = vmatprep.subr.bf16.mxu0 %v604
      %624 = vmatpush1.bf16.msra.mxu0 %v603
      %625 = vmatprep.subr.bf16.mxu0 %v606
      %626 = vmatpush1.bf16.msra.mxu0 %v605
      %627 = vmatprep.subr.bf16.mxu0 0
      %628 = vmatpush1.bf16.msra.mxu0 0
      %629 = vmatprep.subr.bf16.mxu0 0
      %630 = vmatpush1.bf16.msra.mxu0 0
      %631 = vmatprep.subr.bf16.mxu0 0
      %632 = vmatpush1.bf16.msra.mxu0 0
      %633 = vmatprep.subr.bf16.mxu0 0
      %634 = vmatpush1.bf16.msra.mxu0 0
      %635 = vmatprep.subr.bf16.mxu0 0
      %636 = vmatpush1.bf16.msra.mxu0 0
      %637 = vmatprep.subr.bf16.mxu0 0
      %638 = vmatpush1.bf16.msra.mxu0 0
      %639 = vmatprep.subr.bf16.mxu0 0
      %640 = vmatpush1.bf16.msra.mxu0 0
      %641 = vmatprep.subr.bf16.mxu0 0
      %642 = vmatpush1.bf16.msra.mxu0 0
      %643 = vmatprep.subr.bf16.mxu0 0
      %644 = vmatpush1.bf16.msra.mxu0 0
      %645 = vmatprep.subr.bf16.mxu0 0
      %646 = vmatpush1.bf16.msra.mxu0 0
      %647 = vmatprep.subr.bf16.mxu0 0
      %648 = vmatpush1.bf16.msra.mxu0 0
      %649 = vmatprep.subr.bf16.mxu0 0
      %650 = vmatpush1.bf16.msra.mxu0 0
      %651 = vmatprep.mubr.bf16.mxu0 0
      %652 = vmatmul.mubr.bf16.gmra.mrb[0].mxu0 %v617
      %v653 = vpop.f32.mrb[0].mxu0
      %v654 = vadd.f32 %v550, %v653
      %v655 = vpop.f32.mrb[0].mxu0
      %v656 = vadd.f32 %v550, %v655
      %v657 = vpop.f32.mrb[0].mxu0
      %v658 = vadd.f32 %v555, %v657
      %v659 = vpop.f32.mrb[0].mxu0
      %v660 = vadd.f32 %v555, %v659
      %661 = vdwg.mxu0
      %v662 = vtanh.pop %v654
      %v663 = vtanh.pop %v656
      %v664 = vxor.u32 %v658, 2147483648
      %v665 = vxor.u32 %v660, 2147483648
      %v666 = vmul.f32 %v664, 1.442695
      %v667 = vpow.pop %v666
      %v668 = vmul.f32 %v665, 1.442695
      %v669 = vpow.pop %v668
      %v670 = vadd.f32 %v667, 1.0
      %v671 = vadd.f32 %v669, 1.0
      %v672 = vrcp.pop %v670
      %v673 = vmul.f32 1.0, %v672
      %v674 = vrcp.pop %v671
      %v675 = vmul.f32 1.0, %v674
      %v676 = vmul.f32 %v662, %v673
      %v677 = vmul.f32 %v663, %v675
      %v680 = vcombine.low %v676, %v677
      %682 = vst [vmem:[%s333] sm:$0xff] %v680
      %v683 = vld [vmem:[%s5] sm:$0xf]
      %v684 = vld [vmem:[%s6] sm:$0xf]
      %686 = vset.pattern.permute.xlu0 0
      %687 = vperm.xlu0 %686, %v684
      %v688 = vpop.permute.xlu0 %687
      %v690 = vrot.slane %v676, 4
      %v691 = vrot.slane %v677, 4
      %vm692 = vcmask 31744
      %v694 = vsel %vm692, %v683, 0
      %vm696 = vcmask 1043456
      %v697 = vsel %vm696, %v690, 0
      %v699 = vsel %vm696, %v691, 0
      %701 = vmatprep.subr.mxu0 %v699
      %702 = vmatpush1.msra.mxu0 %v697
      %703 = vmatprep.subr.mxu0 0.0
      %704 = vmatpush1.msra.mxu0 0.0
      %705 = vmatprep.subr.mxu0 0.0
      %706 = vmatpush1.msra.mxu0 0.0
      %707 = vmatprep.subr.mxu0 0.0
      %708 = vmatpush1.msra.mxu0 0.0
      %709 = vmatprep.subr.mxu0 0.0
      %710 = vmatpush1.msra.mxu0 0.0
      %711 = vmatprep.subr.mxu0 0.0
      %712 = vmatpush1.msra.mxu0 0.0
      %713 = vmatprep.subr.mxu0 0.0
      %714 = vmatpush1.msra.mxu0 0.0
      %715 = vmatprep.subr.mxu0 0.0
      %716 = vmatpush1.msra.mxu0 0.0
      %717 = vmatprep.subr.mxu0 0.0
      %718 = vmatpush1.msra.mxu0 0.0
      %719 = vmatprep.subr.mxu0 0.0
      %720 = vmatpush1.msra.mxu0 0.0
      %721 = vmatprep.subr.mxu0 0.0
      %722 = vmatpush1.msra.mxu0 0.0
      %723 = vmatprep.subr.mxu0 0.0
      %724 = vmatpush1.msra.mxu0 0.0
      %725 = vmatprep.subr.mxu0 0.0
      %726 = vmatpush1.msra.mxu0 0.0
      %727 = vmatprep.subr.mxu0 0.0
      %728 = vmatpush1.msra.mxu0 0.0
      %729 = vmatprep.subr.mxu0 0.0
      %730 = vmatpush1.msra.mxu0 0.0
      %731 = vmatprep.subr.mxu0 0.0
      %732 = vmatpush1.msra.mxu0 0.0
      %733 = vmatprep.subr.mxu0 0.0
      %734 = vmatpush1.msra.mxu0 0.0
      %735 = vmatprep.subr.mxu0 0.0
      %736 = vmatpush1.msra.mxu0 0.0
      %737 = vmatprep.subr.mxu0 0.0
      %738 = vmatpush1.msra.mxu0 0.0
      %739 = vmatprep.subr.mxu0 0.0
      %740 = vmatpush1.msra.mxu0 0.0
      %741 = vmatprep.subr.mxu0 0.0
      %742 = vmatpush1.msra.mxu0 0.0
      %743 = vmatprep.subr.mxu0 0.0
      %744 = vmatpush1.msra.mxu0 0.0
      %745 = vmatprep.subr.mxu0 0.0
      %746 = vmatpush1.msra.mxu0 0.0
      %747 = vmatprep.subr.mxu0 0.0
      %748 = vmatpush1.msra.mxu0 0.0
      %749 = vmatprep.subr.mxu0 0.0
      %750 = vmatpush1.msra.mxu0 0.0
      %751 = vmatprep.subr.mxu0 0.0
      %752 = vmatpush1.msra.mxu0 0.0
      %753 = vmatprep.subr.mxu0 0.0
      %754 = vmatpush1.msra.mxu0 0.0
      %755 = vmatprep.subr.mxu0 0.0
      %756 = vmatpush1.msra.mxu0 0.0
      %757 = vmatprep.subr.mxu0 0.0
      %758 = vmatpush1.msra.mxu0 0.0
      %759 = vmatprep.subr.mxu0 0.0
      %760 = vmatpush1.msra.mxu0 0.0
      %761 = vmatprep.subr.mxu0 0.0
      %762 = vmatpush1.msra.mxu0 0.0
      %763 = vmatprep.subr.mxu0 0.0
      %764 = vmatpush1.msra.mxu0 0.0
      %765 = vmatprep.mubr.f32.mxu0 0.0
      %766 = vmatmul.mubr.f32.gmra.mrb[0].mxu0 %v694
      %v767 = vpop.f32.mrb[0].mxu0
      %v768 = vadd.f32 %v688, %v767
      %v769 = vpop.f32.mrb[0].mxu0
      %v770 = vadd.f32 %v688, %v769
      %771 = vdwg.mxu0
      %v772 = vadd.f32 %v768, %v346
      %v773 = vadd.f32 %v770, %v347
      %v776 = vcombine.low %v772, %v773
      %778 = vst [vmem:[%s338] sm:$0xff] %v776
      %p779 = scmp.lt.s32.totalorder %s20, 1
      %s780 = scalar_select %p779, %s20, 1
      %s781 = smul.addr %s780, 2
      %s782 = smul.addr %s781, 4
      %s783 = scalar_lea.vmem %s7, %s782
      %p784 = scmp.lt.s32.totalorder %s20, 1
      %s785 = scalar_select %p784, %s20, 1
      %s786 = smul.addr %s785, 2
      %s787 = smul.addr %s786, 4
      %s788 = scalar_lea.vmem %s8, %s787
      // Predicated region
      $region49: #{gated_masked_conv.1} parent=47 // pred_check
        %p789 = pneg %p195
      $region50: #{gated_masked_conv.1} parent=47 // pred_check_branch
        %791 = sbr.rel (%p789) target = $region52
      $region51: #{gated_masked_conv.1} parent=47 // pred_region
        _
      $region52: #{gated_masked_conv.1} parent=47 // pred_fallthru
        _
      // Predicated region
      $region53: #{gated_masked_conv.1} parent=47 // pred_check
        %p792 = pneg %p221
      $region54: #{gated_masked_conv.1} parent=47 // pred_check_branch
        %794 = sbr.rel (%p792) target = $region56
      $region55: #{gated_masked_conv.1} parent=47 // pred_region
        _
      $region56: #{gated_masked_conv.1} parent=47 // pred_fallthru
        _
    $region48: #{gated_masked_conv.1} parent=5 // pred_fallthru
      _
    %p795 = scmp.le.s32.totalorder 2, %s15
    // Predicated region
    $region57: #{gated_masked_conv.1} parent=5 // pred_check
      %p796 = pneg %p795
    $region58: #{gated_masked_conv.1} parent=5 // pred_check_branch
      %798 = sbr.rel (%p796) target = $region60
    $region59: #{gated_masked_conv.1} parent=5 // pred_region
      %s799 = ssub.s32 %s15, 2
      // Predicated region
      $region61: #{gated_masked_conv.1} parent=59 // pred_check
        %p800 = pneg %p201
      $region62: #{gated_masked_conv.1} parent=59 // pred_check_branch
        %802 = sbr.rel (%p800) target = $region64
      $region63: #{gated_masked_conv.1} parent=59 // pred_region
        %p803 = scmp.lt.s32.totalorder %s21, 1
        %s804 = scalar_select %p803, %s21, 1
        %s805 = smul.addr %s804, 2
        %s806 = smul.addr %s805, 4
        %s807 = scalar_lea.vmem %s7, %s806
      $region64: #{gated_masked_conv.1} parent=59 // pred_fallthru
        _
      // Predicated region
      $region65: #{gated_masked_conv.1} parent=59 // pred_check
        %p808 = pneg %p227
      $region66: #{gated_masked_conv.1} parent=59 // pred_check_branch
        %810 = sbr.rel (%p808) target = $region68
      $region67: #{gated_masked_conv.1} parent=59 // pred_region
        %p811 = scmp.lt.s32.totalorder %s21, 1
        %s812 = scalar_select %p811, %s21, 1
        %s813 = smul.addr %s812, 2
        %s814 = smul.addr %s813, 4
        %s815 = scalar_lea.vmem %s8, %s814
      $region68: #{gated_masked_conv.1} parent=59 // pred_fallthru
        _
    $region60: #{gated_masked_conv.1} parent=5 // pred_fallthru
      _
  $region6: #{gated_masked_conv.1} parent=0 // loop_footer
    %s19 = sadd.s32 1, %s15
  $region7: #{gated_masked_conv.1} parent=0 // loop_footer_branch
    %14 = sbr.rel target = $region3
  $region8: #{gated_masked_conv.1} parent=0 // loop_exit
    _

</llo_original>
